<compile_context>
chip_gen: v5e
topology: v5e:2x2
jax: 0.10.0
libtpu: 0.0.40
codegen_flags: <defaults>
</compile_context>

<pallas_src>
import functools

import jax
import jax.numpy as jnp
from jax.experimental import pallas as pl
from jax.experimental.pallas import tpu as pltpu


# ----------------------------------------------------------------------------
# Kernels
# ----------------------------------------------------------------------------
def _bn_train_kernel(eps, momentum,
                     x_ref, gamma_ref, beta_ref, rm_ref, rv_ref,
                     out_ref, new_rm_ref, new_rv_ref):
    # (N, TD) slab; full batch is resident so stats need no cross-step carry.
    x = x_ref[...].astype(jnp.float32)
    n = x.shape[0]
    inv_n = 1.0 / n

    mean = jnp.sum(x, axis=0, keepdims=True) * inv_n          # (1, TD)
    centered = x - mean                                        # (N, TD)
    var = jnp.sum(centered * centered, axis=0, keepdims=True) * inv_n

    inv_std = jax.lax.rsqrt(var + eps)                         # EUP
    scale = gamma_ref[...].astype(jnp.float32) * inv_std       # (1, TD)

    out_ref[...] = (centered * scale
                    + beta_ref[...].astype(jnp.float32)).astype(out_ref.dtype)

    new_rm_ref[...] = (momentum * rm_ref[...].astype(jnp.float32)
                       + (1.0 - momentum) * mean).astype(new_rm_ref.dtype)
    new_rv_ref[...] = (momentum * rv_ref[...].astype(jnp.float32)
                       + (1.0 - momentum) * var).astype(new_rv_ref.dtype)


def _bn_eval_kernel(eps,
                    x_ref, gamma_ref, beta_ref, rm_ref, rv_ref,
                    out_ref):
    # Fold params once per tile: out = x * scale + bias  (2 ops / element).
    inv_std = jax.lax.rsqrt(rv_ref[...].astype(jnp.float32) + eps)
    scale = gamma_ref[...].astype(jnp.float32) * inv_std
    bias = (beta_ref[...].astype(jnp.float32)
            - rm_ref[...].astype(jnp.float32) * scale)
    x = x_ref[...].astype(jnp.float32)
    out_ref[...] = (x * scale + bias).astype(out_ref.dtype)


# ----------------------------------------------------------------------------
# Wrapper
# ----------------------------------------------------------------------------
_VMEM_LIMIT_BYTES = 48 * 1024 * 1024     # safe on v5e/v6e (128 MiB) and v7x (64 MiB)
_TILE_BUDGET_BYTES = 24 * 1024 * 1024    # double-buffered x + out slabs


def _pick_feature_tile(n, d, itemsize, feature_tile=None):
    if feature_tile is not None:
        return feature_tile
    if d % 128 != 0:
        # Small / non-lane-aligned feature dim: one full-D block (block dims
        # equal to array dims satisfy the (8,128) rule).
        return d
    # x tile + out tile, each double-buffered: 4 * N * TD * itemsize bytes.
    cap = _TILE_BUDGET_BYTES // max(1, 4 * n * itemsize)
    td = (cap // 128) * 128
    return int(max(128, min(td, d)))


def batchnorm_forward(x, gamma, beta, running_mean, running_var,
                      *, epsilon=1e-5, momentum=0.9, training=True,
                      feature_tile=None):
    """CustomBatchNorm forward.

    x: (N, D) in its native dtype.  gamma/beta/running_*: (D,).
    Returns (out, new_running_mean, new_running_var); in eval mode the
    running stats are returned unchanged.
    """
    n, d = x.shape
    itemsize = jnp.dtype(x.dtype).itemsize
    td = _pick_feature_tile(n, d, itemsize, feature_tile)
    num_tiles = pl.cdiv(d, td)

    row = lambda v: v.reshape(1, d).astype(jnp.float32)
    gamma_r, beta_r = row(gamma), row(beta)
    rm_r, rv_r = row(running_mean), row(running_var)

    x_spec = pl.BlockSpec((n, td), lambda j: (0, j))
    row_spec = pl.BlockSpec((1, td), lambda j: (0, j))

    compiler_params = pltpu.CompilerParams(
        dimension_semantics=("parallel",),
        vmem_limit_bytes=_VMEM_LIMIT_BYTES,
    )

    if training:
        kernel = functools.partial(_bn_train_kernel,
                                   float(epsilon), float(momentum))
        cost = pl.CostEstimate(
            flops=8 * n * d,
            transcendentals=d,
            bytes_accessed=2 * n * d * itemsize + 6 * d * 4,
        )
        out, new_rm, new_rv = pl.pallas_call(
            kernel,
            out_shape=(
                jax.ShapeDtypeStruct((n, d), x.dtype),
                jax.ShapeDtypeStruct((1, d), jnp.float32),
                jax.ShapeDtypeStruct((1, d), jnp.float32),
            ),
            grid=(num_tiles,),
            in_specs=[x_spec, row_spec, row_spec, row_spec, row_spec],
            out_specs=(x_spec, row_spec, row_spec),
            compiler_params=compiler_params,
            cost_estimate=cost,
        )(x, gamma_r, beta_r, rm_r, rv_r)
        return out, new_rm.reshape(d), new_rv.reshape(d)
    else:
        kernel = functools.partial(_bn_eval_kernel, float(epsilon))
        cost = pl.CostEstimate(
            flops=2 * n * d + 4 * d,
            transcendentals=d,
            bytes_accessed=2 * n * d * itemsize + 4 * d * 4,
        )
        out = pl.pallas_call(
            kernel,
            out_shape=jax.ShapeDtypeStruct((n, d), x.dtype),
            grid=(num_tiles,),
            in_specs=[x_spec, row_spec, row_spec, row_spec, row_spec],
            out_specs=x_spec,
            compiler_params=compiler_params,
            cost_estimate=cost,
        )(x, gamma_r, beta_r, rm_r, rv_r)
        return out, running_mean, running_var


# ----------------------------------------------------------------------------
# Pure-JAX reference (matches the module's momentum convention and
# biased variance, i.e. torch var(unbiased=False) / np.var).
# ----------------------------------------------------------------------------
def _reference_train(x, gamma, beta, rm, rv, eps, momentum):
    xf = x.astype(jnp.float32)
    mean = jnp.mean(xf, axis=0)
    var = jnp.mean((xf - mean) ** 2, axis=0)
    xn = (xf - mean) / jnp.sqrt(var + eps)
    out = gamma * xn + beta
    new_rm = momentum * rm + (1.0 - momentum) * mean
    new_rv = momentum * rv + (1.0 - momentum) * var
    return out.astype(x.dtype), new_rm, new_rv


def _reference_eval(x, gamma, beta, rm, rv, eps):
    xf = x.astype(jnp.float32)
    xn = (xf - rm) / jnp.sqrt(rv + eps)
    return (gamma * xn + beta).astype(x.dtype)


if __name__ == "__main__":
    eps, momentum = 1e-5, 0.9
    key = jax.random.PRNGKey(0)
    k1, k2 = jax.random.split(key)

    # --- Case 1: the module's own shapes (x of shape (10, 5), 5 features) ---
    N, D = 10, 5
    x = jax.random.normal(k1, (N, D), dtype=jnp.float32)
    gamma = jnp.ones((D,), jnp.float32)
    beta = jnp.zeros((D,), jnp.float32)
    rm = jnp.zeros((D,), jnp.float32)
    rv = jnp.ones((D,), jnp.float32)

    out, new_rm, new_rv = batchnorm_forward(
        x, gamma, beta, rm, rv, epsilon=eps, momentum=momentum, training=True)
    out = jax.block_until_ready(out)
    new_rm = jax.block_until_ready(new_rm)
    new_rv = jax.block_until_ready(new_rv)

    ref_out, ref_rm, ref_rv = _reference_train(x, gamma, beta, rm, rv, eps, momentum)
    assert jnp.allclose(out, ref_out, atol=1e-5, rtol=1e-5)
    assert jnp.allclose(new_rm, ref_rm, atol=1e-6, rtol=1e-6)
    assert jnp.allclose(new_rv, ref_rv, atol=1e-6, rtol=1e-6)

    out_eval, _, _ = batchnorm_forward(
        x, gamma, beta, new_rm, new_rv,
        epsilon=eps, momentum=momentum, training=False)
    out_eval = jax.block_until_ready(out_eval)
    assert jnp.allclose(out_eval,
                        _reference_eval(x, gamma, beta, new_rm, new_rv, eps),
                        atol=1e-5, rtol=1e-5)

    # --- Case 2: lane-aligned features, exercises the tiled (grid > 1) path ---
    N2, D2 = 16, 256
    x2 = jax.random.normal(k2, (N2, D2), dtype=jnp.float32)
    g2 = jnp.ones((D2,), jnp.float32)
    b2 = jnp.zeros((D2,), jnp.float32)
    rm2 = jnp.zeros((D2,), jnp.float32)
    rv2 = jnp.ones((D2,), jnp.float32)

    out2, nrm2, nrv2 = batchnorm_forward(
        x2, g2, b2, rm2, rv2, epsilon=eps, momentum=momentum,
        training=True, feature_tile=128)           # forces grid=(2,)
    out2 = jax.block_until_ready(out2)
    ref2, ref_rm2, ref_rv2 = _reference_train(x2, g2, b2, rm2, rv2, eps, momentum)
    assert jnp.allclose(out2, ref2, atol=1e-5, rtol=1e-5)
    assert jnp.allclose(nrm2, ref_rm2, atol=1e-6, rtol=1e-6)
    assert jnp.allclose(nrv2, ref_rv2, atol=1e-6, rtol=1e-6)

    print("KERNEL_OK")
</pallas_src>

<mosaic_0001>
module attributes {stable_mosaic.version = 11 : i64} {
  func.func @_bn_train_kernel(%arg0: i32, %arg1: memref<10x5xf32, #tpu.memory_space<vmem>>, %arg2: memref<1x5xf32, #tpu.memory_space<vmem>>, %arg3: memref<1x5xf32, #tpu.memory_space<vmem>>, %arg4: memref<1x5xf32, #tpu.memory_space<vmem>>, %arg5: memref<1x5xf32, #tpu.memory_space<vmem>>, %arg6: memref<10x5xf32, #tpu.memory_space<vmem>>, %arg7: memref<1x5xf32, #tpu.memory_space<vmem>>, %arg8: memref<1x5xf32, #tpu.memory_space<vmem>>) attributes {dimension_semantics = [#tpu.dimension_semantics<parallel>], iteration_bounds = array<i64: 1>, scalar_prefetch = 0 : i64, scratch_operands = 0 : i64, tpu.core_type = #tpu.core_type<tc>, window_params = [{transform_indices = @transform_0, window_bounds = array<i64: 10, 5>}, {transform_indices = @transform_1, window_bounds = array<i64: 1, 5>}, {transform_indices = @transform_2, window_bounds = array<i64: 1, 5>}, {transform_indices = @transform_3, window_bounds = array<i64: 1, 5>}, {transform_indices = @transform_4, window_bounds = array<i64: 1, 5>}, {transform_indices = @transform_5, window_bounds = array<i64: 10, 5>}, {transform_indices = @transform_6, window_bounds = array<i64: 1, 5>}, {transform_indices = @transform_7, window_bounds = array<i64: 1, 5>}]} {
    %c0 = arith.constant 0 : index
    %c0_0 = arith.constant 0 : index
    %0 = vector.load %arg1[%c0, %c0_0] : memref<10x5xf32, #tpu.memory_space<vmem>>, vector<10x5xf32>
    %cst = arith.constant dense<0.000000e+00> : vector<5xf32>
    %1 = vector.multi_reduction <add>, %0, %cst [0] : vector<10x5xf32> to vector<5xf32>
    %2 = vector.shape_cast %1 : vector<5xf32> to vector<1x5xf32>
    %cst_1 = arith.constant 1.000000e-01 : f32
    %3 = vector.broadcast %cst_1 : f32 to vector<1x5xf32>
    %4 = arith.mulf %2, %3 : vector<1x5xf32>
    %5 = vector.broadcast %4 : vector<1x5xf32> to vector<10x5xf32>
    %6 = arith.subf %0, %5 : vector<10x5xf32>
    %7 = arith.mulf %6, %6 : vector<10x5xf32>
    %cst_2 = arith.constant dense<0.000000e+00> : vector<5xf32>
    %8 = vector.multi_reduction <add>, %7, %cst_2 [0] : vector<10x5xf32> to vector<5xf32>
    %9 = vector.shape_cast %8 : vector<5xf32> to vector<1x5xf32>
    %cst_3 = arith.constant 1.000000e-01 : f32
    %10 = vector.broadcast %cst_3 : f32 to vector<1x5xf32>
    %11 = arith.mulf %9, %10 : vector<1x5xf32>
    %cst_4 = arith.constant 9.99999974E-6 : f32
    %12 = vector.broadcast %cst_4 : f32 to vector<1x5xf32>
    %13 = arith.addf %11, %12 : vector<1x5xf32>
    %14 = math.rsqrt %13 : vector<1x5xf32>
    %c0_5 = arith.constant 0 : index
    %c0_6 = arith.constant 0 : index
    %15 = vector.load %arg2[%c0_5, %c0_6] : memref<1x5xf32, #tpu.memory_space<vmem>>, vector<1x5xf32>
    %16 = arith.mulf %15, %14 : vector<1x5xf32>
    %17 = vector.broadcast %16 : vector<1x5xf32> to vector<10x5xf32>
    %18 = arith.mulf %6, %17 : vector<10x5xf32>
    %c0_7 = arith.constant 0 : index
    %c0_8 = arith.constant 0 : index
    %19 = vector.load %arg3[%c0_7, %c0_8] : memref<1x5xf32, #tpu.memory_space<vmem>>, vector<1x5xf32>
    %20 = vector.broadcast %19 : vector<1x5xf32> to vector<10x5xf32>
    %21 = arith.addf %18, %20 : vector<10x5xf32>
    %c0_9 = arith.constant 0 : index
    %c0_10 = arith.constant 0 : index
    %22 = vector.load %arg6[%c0_9, %c0_10] : memref<10x5xf32, #tpu.memory_space<vmem>>, vector<10x5xf32>
    tpu.vector_store %arg6[%c0_9, %c0_10], %21 {strides = array<i32>} : memref<10x5xf32, #tpu.memory_space<vmem>>, vector<10x5xf32>,
    %c0_11 = arith.constant 0 : index
    %c0_12 = arith.constant 0 : index
    %23 = vector.load %arg4[%c0_11, %c0_12] : memref<1x5xf32, #tpu.memory_space<vmem>>, vector<1x5xf32>
    %cst_13 = arith.constant 0.899999976 : f32
    %24 = vector.broadcast %cst_13 : f32 to vector<1x5xf32>
    %25 = arith.mulf %24, %23 : vector<1x5xf32>
    %cst_14 = arith.constant 1.000000e-01 : f32
    %26 = vector.broadcast %cst_14 : f32 to vector<1x5xf32>
    %27 = arith.mulf %26, %4 : vector<1x5xf32>
    %28 = arith.addf %25, %27 : vector<1x5xf32>
    %c0_15 = arith.constant 0 : index
    %c0_16 = arith.constant 0 : index
    %29 = vector.load %arg7[%c0_15, %c0_16] : memref<1x5xf32, #tpu.memory_space<vmem>>, vector<1x5xf32>
    tpu.vector_store %arg7[%c0_15, %c0_16], %28 {strides = array<i32>} : memref<1x5xf32, #tpu.memory_space<vmem>>, vector<1x5xf32>,
    %c0_17 = arith.constant 0 : index
    %c0_18 = arith.constant 0 : index
    %30 = vector.load %arg5[%c0_17, %c0_18] : memref<1x5xf32, #tpu.memory_space<vmem>>, vector<1x5xf32>
    %cst_19 = arith.constant 0.899999976 : f32
    %31 = vector.broadcast %cst_19 : f32 to vector<1x5xf32>
    %32 = arith.mulf %31, %30 : vector<1x5xf32>
    %cst_20 = arith.constant 1.000000e-01 : f32
    %33 = vector.broadcast %cst_20 : f32 to vector<1x5xf32>
    %34 = arith.mulf %33, %11 : vector<1x5xf32>
    %35 = arith.addf %32, %34 : vector<1x5xf32>
    %c0_21 = arith.constant 0 : index
    %c0_22 = arith.constant 0 : index
    %36 = vector.load %arg8[%c0_21, %c0_22] : memref<1x5xf32, #tpu.memory_space<vmem>>, vector<1x5xf32>
    tpu.vector_store %arg8[%c0_21, %c0_22], %35 {strides = array<i32>} : memref<1x5xf32, #tpu.memory_space<vmem>>, vector<1x5xf32>,
    return
  }
  func.func @transform_0(%arg0: i32) -> (i32, i32) {
    %c0_i32 = arith.constant 0 : i32
    %c0_i32_0 = arith.constant 0 : i32
    return %c0_i32, %arg0 : i32, i32
  }
  func.func @transform_1(%arg0: i32) -> (i32, i32) {
    %c0_i32 = arith.constant 0 : i32
    %c0_i32_0 = arith.constant 0 : i32
    return %c0_i32, %arg0 : i32, i32
  }
  func.func @transform_2(%arg0: i32) -> (i32, i32) {
    %c0_i32 = arith.constant 0 : i32
    %c0_i32_0 = arith.constant 0 : i32
    return %c0_i32, %arg0 : i32, i32
  }
  func.func @transform_3(%arg0: i32) -> (i32, i32) {
    %c0_i32 = arith.constant 0 : i32
    %c0_i32_0 = arith.constant 0 : i32
    return %c0_i32, %arg0 : i32, i32
  }
  func.func @transform_4(%arg0: i32) -> (i32, i32) {
    %c0_i32 = arith.constant 0 : i32
    %c0_i32_0 = arith.constant 0 : i32
    return %c0_i32, %arg0 : i32, i32
  }
  func.func @transform_5(%arg0: i32) -> (i32, i32) {
    %c0_i32 = arith.constant 0 : i32
    %c0_i32_0 = arith.constant 0 : i32
    return %c0_i32, %arg0 : i32, i32
  }
  func.func @transform_6(%arg0: i32) -> (i32, i32) {
    %c0_i32 = arith.constant 0 : i32
    %c0_i32_0 = arith.constant 0 : i32
    return %c0_i32, %arg0 : i32, i32
  }
  func.func @transform_7(%arg0: i32) -> (i32, i32) {
    %c0_i32 = arith.constant 0 : i32
    %c0_i32_0 = arith.constant 0 : i32
    return %c0_i32, %arg0 : i32, i32
  }
}

</mosaic_0001>

<llo_original>
// kernel: tpu_custom_call.1
$region0: #{tpu_custom_call.1}
  #allocation0 [shape = 'u32[]', space=smem, size = 0x4, offset = 0x4, fixed_abs, tag = 'smem constant byte address 0x4 - core index']
  #allocation1 [shape = 'u32[72,128]{1,0:T(1,128)}', space=vmem, size = 0x9000, scoped, tag = 'internal scratch']
  %s0 = inlined_call_operand.vmem [shape: f32[10,5], index: 0, kind: input, shape index: {}]
  %s1 = inlined_call_operand.vmem [shape: f32[1,5], index: 1, kind: input, shape index: {}]
  %s2 = inlined_call_operand.vmem [shape: f32[1,5], index: 2, kind: input, shape index: {}]
  %s3 = inlined_call_operand.vmem [shape: f32[1,5], index: 3, kind: input, shape index: {}]
  %s4 = inlined_call_operand.vmem [shape: f32[1,5], index: 4, kind: input, shape index: {}]
  %s5 = inlined_call_operand.vmem [shape: f32[10,5], index: 5, kind: output, shape index: {0}]
  %s6 = inlined_call_operand.hbm [shape: f32[1,5], index: 6, kind: output, shape index: {1}]
  %s7 = inlined_call_operand.hbm [shape: f32[1,5], index: 7, kind: output, shape index: {2}]
  %8 = xla_tuple %s5, %s6, %s7
  %s9 = sld [smem:[#allocation0]]
  $region46: #{tpu_custom_call.1} parent=0
    _
  %s11 = ssub.s32 1, %s9
  %s12 = scalar_select 0, %s11, %s9
  $region1: #{tpu_custom_call.1} parent=0
    #allocation2 [shape = 'u8[512]{0}', space=vmem, size = 0x400, scoped, tag = 'output window, operand 1, single buffered']
    #allocation3 [shape = 's32[1]{0}', space=sflag, size = 0x4, scoped, tag = 'scoped memory for tpu_custom_call.1']
    #allocation4 [shape = 'u8[512]{0}', space=vmem, size = 0x400, scoped, tag = 'output window, operand 2, single buffered']
    #allocation5 [shape = 's32[1]{0}', space=sflag, size = 0x4, scoped, tag = 'scoped memory for tpu_custom_call.1']
    %13 = vsyncpa [#allocation3], 0
    %14 = vsyncpa [#allocation5], 0
    // Predicated region
    $region2: #{tpu_custom_call.1} parent=1 // pred_check
      _
    $region3: #{tpu_custom_call.1} parent=1 // pred_check_branch
      %16 = sbr.rel (0) target = $region5
    $region4: #{tpu_custom_call.1} parent=1 // pred_region
      _
    $region5: #{tpu_custom_call.1} parent=1 // pred_fallthru
      _
    // Predicated region
    $region6: #{tpu_custom_call.1} parent=1 // pred_check
      _
    $region7: #{tpu_custom_call.1} parent=1 // pred_check_branch
      %18 = sbr.rel (0) target = $region9
    $region8: #{tpu_custom_call.1} parent=1 // pred_region
      _
    $region9: #{tpu_custom_call.1} parent=1 // pred_fallthru
      _
    // Predicated region
    $region10: #{tpu_custom_call.1} parent=1 // pred_check
      _
    $region11: #{tpu_custom_call.1} parent=1 // pred_check_branch
      %20 = sbr.rel (0) target = $region13
    $region12: #{tpu_custom_call.1} parent=1 // pred_region
      _
    $region13: #{tpu_custom_call.1} parent=1 // pred_fallthru
      _
    // Predicated region
    $region14: #{tpu_custom_call.1} parent=1 // pred_check
      _
    $region15: #{tpu_custom_call.1} parent=1 // pred_check_branch
      %22 = sbr.rel (0) target = $region17
    $region16: #{tpu_custom_call.1} parent=1 // pred_region
      _
    $region17: #{tpu_custom_call.1} parent=1 // pred_fallthru
      _
    // Predicated region
    $region18: #{tpu_custom_call.1} parent=1 // pred_check
      _
    $region19: #{tpu_custom_call.1} parent=1 // pred_check_branch
      %24 = sbr.rel (0) target = $region21
    $region20: #{tpu_custom_call.1} parent=1 // pred_region
      _
    $region21: #{tpu_custom_call.1} parent=1 // pred_fallthru
      _
    %v25 = vld [vmem:[%s0] sm:$0xff]
    %v26 = vld [vmem:[%s0 + $0x8] sm:$0x3]
    %vm27 = vcmask 39936
    %v28 = vsel %vm27, %v25, 0.0
    %vm29 = vcmask 33792
    %v30 = vsel %vm29, %v26, 0.0
    %v31 = vadd.f32 %v28, %v30
    %v32 = vrot.slane %v31, 4
    %v33 = vadd.f32 %v31, %v32
    %v34 = vrot.slane %v33, 2
    %v35 = vadd.f32 %v33, %v34
    %v36 = vrot.slane %v35, 1
    %v37 = vadd.f32 %v35, %v36
    %v38 = vmul.f32 %v37, 0.1
    %v39 = vsub.f32 %v25, %v38
    %v40 = vsub.f32 %v26, %v38
    %v41 = vmul.f32 %v39, %v39
    %v42 = vmul.f32 %v40, %v40
    %v43 = vsel %vm27, %v41, 0.0
    %v44 = vsel %vm29, %v42, 0.0
    %v45 = vadd.f32 %v43, %v44
    %v46 = vrot.slane %v45, 4
    %v47 = vadd.f32 %v45, %v46
    %v48 = vrot.slane %v47, 2
    %v49 = vadd.f32 %v47, %v48
    %v50 = vrot.slane %v49, 1
    %v51 = vadd.f32 %v49, %v50
    %v52 = vmul.f32 %v51, 0.1
    %v53 = vadd.f32 %v52, 1e-05
    %v54 = vrsqrt.pop %v53
    %v55 = vmul.f32 %v54, %v53
    %v56 = vmul.f32 %v55, %v54
    %v57 = vmul.f32 0.5, %v56
    %v58 = vsub.f32 1.5, %v57
    %v59 = vmul.f32 %v54, %v58
    %vm60 = vweird.f32 %v53
    %vm61 = vweird.f32 %v54
    %vm62 = vmor %vm60, %vm61
    %v63 = vsel %vm62, %v54, %v59
    %v64 = vld [vmem:[%s1] sm:$0x1]
    %v65 = vmul.f32 %v64, %v63
    %v67 = vperm.slane %v65, 0
    %v69 = vmul.f32 %v39, %v67
    %v70 = vmul.f32 %v40, %v67
    %v71 = vld [vmem:[%s2] sm:$0x1]
    %v73 = vperm.slane %v71, 0
    %v75 = vadd.f32 %v69, %v73
    %v76 = vadd.f32 %v70, %v73
    %77 = vst.msk [vmem:[%s5] sm:$0xff] %vm27, %v75
    %78 = vst.msk [vmem:[%s5 + $0x8] sm:$0x3] %vm29, %v76
    %v79 = vld [vmem:[%s3] sm:$0x1]
    %v80 = vmul.f32 %v79, 0.9
    %v81 = vmul.f32 %v38, 0.1
    %v82 = vadd.f32 %v80, %v81
    %vm83 = vcmask 32768
    %84 = vst.msk [vmem:[#allocation2] sm:$0x1] %vm83, %v82
    %v85 = vld [vmem:[%s4] sm:$0x1]
    %v86 = vmul.f32 %v85, 0.9
    %v87 = vmul.f32 %v52, 0.1
    %v88 = vadd.f32 %v86, %v87
    %89 = vst.msk [vmem:[#allocation4] sm:$0x1] %vm83, %v88
    // Predicated region
    $region22: #{tpu_custom_call.1} parent=1 // pred_check
      _
    $region23: #{tpu_custom_call.1} parent=1 // pred_check_branch
      %91 = sbr.rel (0) target = $region25
    $region24: #{tpu_custom_call.1} parent=1 // pred_region
      _
    $region25: #{tpu_custom_call.1} parent=1 // pred_fallthru
      _
    // Predicated region
    $region26: #{tpu_custom_call.1} parent=1 // pred_check
      _
    $region27: #{tpu_custom_call.1} parent=1 // pred_check_branch
      %93 = sbr.rel (0) target = $region29
    $region28: #{tpu_custom_call.1} parent=1 // pred_region
      %95 = vsyncadd [#allocation3], 0
      %s97 = sshll.u32 [#allocation2], 4
      %s98 = int_to_ptr.vmem [resolvable:$true] %s97
      %s99 = sshll.u32 %s6, 4
      %s100 = int_to_ptr.hbm [resolvable:$true] %s99
      %102 = dma.vmem_to_hbm [thread:$0]  %s98, 16, %s100, [#allocation3]
    $region29: #{tpu_custom_call.1} parent=1 // pred_fallthru
      _
    // Predicated region
    $region30: #{tpu_custom_call.1} parent=1 // pred_check
      _
    $region31: #{tpu_custom_call.1} parent=1 // pred_check_branch
      %104 = sbr.rel (0) target = $region33
    $region32: #{tpu_custom_call.1} parent=1 // pred_region
      %106 = vsyncadd [#allocation5], 0
      %s108 = sshll.u32 [#allocation4], 4
      %s109 = int_to_ptr.vmem [resolvable:$true] %s108
      %s110 = sshll.u32 %s7, 4
      %s111 = int_to_ptr.hbm [resolvable:$true] %s110
      %113 = dma.vmem_to_hbm [thread:$0]  %s109, 16, %s111, [#allocation5]
    $region33: #{tpu_custom_call.1} parent=1 // pred_fallthru
      _
    // Predicated region
    $region34: #{tpu_custom_call.1} parent=1 // pred_check
      _
    $region35: #{tpu_custom_call.1} parent=1 // pred_check_branch
      %115 = sbr.rel (0) target = $region37
    $region36: #{tpu_custom_call.1} parent=1 // pred_region
      _
    $region37: #{tpu_custom_call.1} parent=1 // pred_fallthru
      _
    // Predicated region
    $region38: #{tpu_custom_call.1} parent=1 // pred_check
      _
    $region39: #{tpu_custom_call.1} parent=1 // pred_check_branch
      %117 = sbr.rel (0) target = $region41
    $region40: #{tpu_custom_call.1} parent=1 // pred_region
      %119 = dma.done [#allocation3], 16
    $region41: #{tpu_custom_call.1} parent=1 // pred_fallthru
      _
    // Predicated region
    $region42: #{tpu_custom_call.1} parent=1 // pred_check
      _
    $region43: #{tpu_custom_call.1} parent=1 // pred_check_branch
      %121 = sbr.rel (0) target = $region45
    $region44: #{tpu_custom_call.1} parent=1 // pred_region
      %123 = dma.done [#allocation5], 16
    $region45: #{tpu_custom_call.1} parent=1 // pred_fallthru
      _
    %124 = vsyncpa [#allocation3], 1
    %125 = vsyncpa [#allocation5], 1

</llo_original>
